<compile_context>
chip_gen: v7x
topology: tpu7x:2x2x1
jax: 0.10.0
libtpu: 0.0.40
codegen_flags: <defaults>
</compile_context>

<pallas_src>
import functools
import math

import jax
import jax.numpy as jnp
from jax import lax
from jax.experimental import pallas as pl
from jax.experimental.pallas import tpu as pltpu

_LANES = 128
_MAX_TILE_ROWS = 1024          # (1024, 128) f32 block = 512 KiB
_TWO_PI = 6.283185307179586
_INV_2_24 = 1.0 / 16777216.0   # 2**-24


def _hash_u32(x):
    """murmur3 fmix32-style finalizer: good avalanche, pure 32-bit VPU ops."""
    x = x ^ (x >> 16)
    x = x * jnp.uint32(0x7FEB352D)
    x = x ^ (x >> 15)
    x = x * jnp.uint32(0x846CA68B)
    x = x ^ (x >> 16)
    return x


def _uniform_open01(bits_u32):
    """Top 24 bits of a u32 -> float32 uniform in (0, 1) (never 0 -> log-safe)."""
    u24 = (bits_u32 >> 8).astype(jnp.int32).astype(jnp.float32)
    return (u24 + 0.5) * _INV_2_24


def _awgn_kernel(seed_ref, x_ref, o_ref, *, sigma):
    rows, lanes = x_ref.shape
    half = rows // 2  # rows is always a multiple of 8 -> even

    seed = seed_ref[0].astype(jnp.uint32)
    k1 = _hash_u32(seed + jnp.uint32(0x9E3779B9))
    k2 = _hash_u32(seed + jnp.uint32(0x85EBCA6B))

    # Globally-unique per-element counter, laid out over *half* the tile:
    # Box-Muller yields two independent normals per counter (z0 for the top
    # half of the tile, z1 for the bottom half) -> half the EUP work.
    row_ids = lax.broadcasted_iota(jnp.int32, (half, lanes), 0).astype(jnp.uint32)
    col_ids = lax.broadcasted_iota(jnp.int32, (half, lanes), 1).astype(jnp.uint32)
    base = pl.program_id(0).astype(jnp.uint32) * jnp.uint32(half)
    counter = (base + row_ids) * jnp.uint32(lanes) + col_ids

    u1 = _uniform_open01(_hash_u32(counter ^ k1))
    u2 = _uniform_open01(_hash_u32(counter ^ k2))

    # Box-Muller: exact standard normals from two uniforms.
    r_mag = jnp.sqrt(-2.0 * jnp.log(u1)) * sigma
    theta = _TWO_PI * u2
    z0 = r_mag * jnp.cos(theta)
    z1 = r_mag * jnp.sin(theta)

    dt = o_ref.dtype
    o_ref[:half, :] = x_ref[:half, :] + z0.astype(dt)
    o_ref[half:, :] = x_ref[half:, :] + z1.astype(dt)
    # TODO(synk): for bf16 inputs on v6e/v7x, a bf16 noise path could relieve
    # the EUP slot further; kept f32 noise generation for statistical quality.


def awgn(x: jax.Array, snr, seed: int = 0) -> jax.Array:
    """Apply the AWGN channel to `x`. `snr` in dB; snr=None is a passthrough."""
    if snr is None:
        return x

    # sigma = sqrt(10^(-snr/10) / 2)  -- assumes unit average symbol energy.
    sigma = float(math.sqrt(10.0 ** (-float(snr) / 10.0) / 2.0))

    orig_shape = x.shape
    orig_dtype = x.dtype
    flat = x.reshape(-1)
    n = flat.shape[0]
    if n == 0:
        return x

    # Lane-dense 2-D slab: (rows, 128), rows rounded up to a multiple of 8.
    rows = -(-n // _LANES)
    rows = -(-rows // 8) * 8
    padded = rows * _LANES
    needs_pad = padded != n
    if needs_pad:  # only off the common path: costs one extra pad + slice pass
        flat = jnp.pad(flat, (0, padded - n))
    x2d = flat.reshape(rows, _LANES)

    tile_rows = min(rows, _MAX_TILE_ROWS)      # multiple of 8, fits VMEM on all gens
    grid = (pl.cdiv(rows, tile_rows),)         # uneven last block handled by masking

    seed_arr = jnp.array([seed], dtype=jnp.int32)

    out2d = pl.pallas_call(
        functools.partial(_awgn_kernel, sigma=sigma),
        out_shape=jax.ShapeDtypeStruct((rows, _LANES), orig_dtype),
        grid_spec=pltpu.PrefetchScalarGridSpec(
            num_scalar_prefetch=1,
            grid=grid,
            in_specs=[pl.BlockSpec((tile_rows, _LANES), lambda i, s: (i, 0))],
            out_specs=pl.BlockSpec((tile_rows, _LANES), lambda i, s: (i, 0)),
        ),
        compiler_params=pltpu.CompilerParams(
            # Stateless per-element hash -> grid steps are independent; lets
            # v7x shard the axis across both TensorCores (no-op on v5e/v6e).
            dimension_semantics=("parallel",),
        ),
    )(seed_arr, x2d)

    out = out2d.reshape(-1)
    if needs_pad:
        out = out[:n]
    return out.reshape(orig_shape)


if __name__ == "__main__":
    key = jax.random.PRNGKey(0)
    # Small NCHW-ish input; AWGN is shape-agnostic.
    x = jax.random.normal(key, (2, 4, 16, 16), dtype=jnp.float32)

    snr_db = 10.0
    y = jax.block_until_ready(awgn(x, snr_db, seed=0))

    # Shape/dtype preserved; added noise std ~= sigma = sqrt(10^(-snr/10)/2).
    assert y.shape == x.shape and y.dtype == x.dtype
    noise = y - x
    sigma_expected = (10.0 ** (-snr_db / 10.0) / 2.0) ** 0.5
    sigma_measured = float(jnp.std(noise))
    assert abs(sigma_measured - sigma_expected) < 0.25 * sigma_expected, (
        sigma_measured,
        sigma_expected,
    )
    assert abs(float(jnp.mean(noise))) < 0.05

    # Ragged shape exercises the pad/slice path.
    x2 = jax.random.normal(jax.random.PRNGKey(1), (3, 2, 100), dtype=jnp.float32)
    y2 = jax.block_until_ready(awgn(x2, snr_db, seed=7))
    assert y2.shape == x2.shape and y2.dtype == x2.dtype
    sigma2 = float(jnp.std(y2 - x2))
    assert abs(sigma2 - sigma_expected) < 0.3 * sigma_expected, (sigma2, sigma_expected)

    # Passthrough case (snr=None) must be the identity.
    y_pass = jax.block_until_ready(awgn(x, None))
    assert bool(jnp.all(y_pass == x))

    print("KERNEL_OK")
</pallas_src>

<mosaic_0001>
module attributes {stable_mosaic.version = 11 : i64} {
  func.func @_awgn_kernel(%arg0: i32, %arg1: memref<1xi32, #tpu.memory_space<smem>>, %arg2: memref<16x128xf32, #tpu.memory_space<vmem>>, %arg3: memref<16x128xf32, #tpu.memory_space<vmem>>) attributes {dimension_semantics = [#tpu.dimension_semantics<parallel>], iteration_bounds = array<i64: 1>, scalar_prefetch = 1 : i64, scratch_operands = 0 : i64, tpu.core_type = #tpu.core_type<tc>, window_params = [{transform_indices = @transform_0, window_bounds = array<i64: 16, 128>}, {transform_indices = @transform_1, window_bounds = array<i64: 16, 128>}]} {
    %c0 = arith.constant 0 : index
    %0 = memref.load %arg1[%c0] : memref<1xi32, #tpu.memory_space<smem>>
    %c-1640531527_i32 = arith.constant -1640531527 : i32
    %1 = arith.addi %0, %c-1640531527_i32 : i32
    %c16_i32 = arith.constant 16 : i32
    %2 = arith.shrui %1, %c16_i32 : i32
    %3 = arith.xori %1, %2 : i32
    %c2146121005_i32 = arith.constant 2146121005 : i32
    %4 = arith.muli %3, %c2146121005_i32 : i32
    %c15_i32 = arith.constant 15 : i32
    %5 = arith.shrui %4, %c15_i32 : i32
    %6 = arith.xori %4, %5 : i32
    %c-2073254261_i32 = arith.constant -2073254261 : i32
    %7 = arith.muli %6, %c-2073254261_i32 : i32
    %c16_i32_0 = arith.constant 16 : i32
    %8 = arith.shrui %7, %c16_i32_0 : i32
    %9 = arith.xori %7, %8 : i32
    %c-2048144789_i32 = arith.constant -2048144789 : i32
    %10 = arith.addi %0, %c-2048144789_i32 : i32
    %c16_i32_1 = arith.constant 16 : i32
    %11 = arith.shrui %10, %c16_i32_1 : i32
    %12 = arith.xori %10, %11 : i32
    %c2146121005_i32_2 = arith.constant 2146121005 : i32
    %13 = arith.muli %12, %c2146121005_i32_2 : i32
    %c15_i32_3 = arith.constant 15 : i32
    %14 = arith.shrui %13, %c15_i32_3 : i32
    %15 = arith.xori %13, %14 : i32
    %c-2073254261_i32_4 = arith.constant -2073254261 : i32
    %16 = arith.muli %15, %c-2073254261_i32_4 : i32
    %c16_i32_5 = arith.constant 16 : i32
    %17 = arith.shrui %16, %c16_i32_5 : i32
    %18 = arith.xori %16, %17 : i32
    %19 = tpu.iota {dimensions = array<i32: 0>} : vector<8x128xi32>
    %20 = tpu.iota {dimensions = array<i32: 1>} : vector<8x128xi32>
    %c8_i32 = arith.constant 8 : i32
    %21 = arith.muli %arg0, %c8_i32 : i32
    %22 = vector.broadcast %21 : i32 to vector<8x128xi32>
    %23 = arith.addi %22, %19 : vector<8x128xi32>
    %c128_i32 = arith.constant 128 : i32
    %24 = vector.broadcast %c128_i32 : i32 to vector<8x128xi32>
    %25 = arith.muli %23, %24 : vector<8x128xi32>
    %26 = arith.addi %25, %20 : vector<8x128xi32>
    %27 = vector.broadcast %9 : i32 to vector<8x128xi32>
    %28 = arith.xori %26, %27 : vector<8x128xi32>
    %c16_i32_6 = arith.constant 16 : i32
    %29 = vector.broadcast %c16_i32_6 : i32 to vector<8x128xi32>
    %30 = arith.shrui %28, %29 : vector<8x128xi32>
    %31 = arith.xori %28, %30 : vector<8x128xi32>
    %c2146121005_i32_7 = arith.constant 2146121005 : i32
    %32 = vector.broadcast %c2146121005_i32_7 : i32 to vector<8x128xi32>
    %33 = arith.muli %31, %32 : vector<8x128xi32>
    %c15_i32_8 = arith.constant 15 : i32
    %34 = vector.broadcast %c15_i32_8 : i32 to vector<8x128xi32>
    %35 = arith.shrui %33, %34 : vector<8x128xi32>
    %36 = arith.xori %33, %35 : vector<8x128xi32>
    %c-2073254261_i32_9 = arith.constant -2073254261 : i32
    %37 = vector.broadcast %c-2073254261_i32_9 : i32 to vector<8x128xi32>
    %38 = arith.muli %36, %37 : vector<8x128xi32>
    %c16_i32_10 = arith.constant 16 : i32
    %39 = vector.broadcast %c16_i32_10 : i32 to vector<8x128xi32>
    %40 = arith.shrui %38, %39 : vector<8x128xi32>
    %41 = arith.xori %38, %40 : vector<8x128xi32>
    %c8_i32_11 = arith.constant 8 : i32
    %42 = vector.broadcast %c8_i32_11 : i32 to vector<8x128xi32>
    %43 = arith.shrui %41, %42 : vector<8x128xi32>
    %44 = arith.sitofp %43 : vector<8x128xi32> to vector<8x128xf32>
    %cst = arith.constant 5.000000e-01 : f32
    %45 = vector.broadcast %cst : f32 to vector<8x128xf32>
    %46 = arith.addf %44, %45 : vector<8x128xf32>
    %cst_12 = arith.constant 5.96046448E-8 : f32
    %47 = vector.broadcast %cst_12 : f32 to vector<8x128xf32>
    %48 = arith.mulf %46, %47 : vector<8x128xf32>
    %49 = vector.broadcast %18 : i32 to vector<8x128xi32>
    %50 = arith.xori %26, %49 : vector<8x128xi32>
    %c16_i32_13 = arith.constant 16 : i32
    %51 = vector.broadcast %c16_i32_13 : i32 to vector<8x128xi32>
    %52 = arith.shrui %50, %51 : vector<8x128xi32>
    %53 = arith.xori %50, %52 : vector<8x128xi32>
    %c2146121005_i32_14 = arith.constant 2146121005 : i32
    %54 = vector.broadcast %c2146121005_i32_14 : i32 to vector<8x128xi32>
    %55 = arith.muli %53, %54 : vector<8x128xi32>
    %c15_i32_15 = arith.constant 15 : i32
    %56 = vector.broadcast %c15_i32_15 : i32 to vector<8x128xi32>
    %57 = arith.shrui %55, %56 : vector<8x128xi32>
    %58 = arith.xori %55, %57 : vector<8x128xi32>
    %c-2073254261_i32_16 = arith.constant -2073254261 : i32
    %59 = vector.broadcast %c-2073254261_i32_16 : i32 to vector<8x128xi32>
    %60 = arith.muli %58, %59 : vector<8x128xi32>
    %c16_i32_17 = arith.constant 16 : i32
    %61 = vector.broadcast %c16_i32_17 : i32 to vector<8x128xi32>
    %62 = arith.shrui %60, %61 : vector<8x128xi32>
    %63 = arith.xori %60, %62 : vector<8x128xi32>
    %c8_i32_18 = arith.constant 8 : i32
    %64 = vector.broadcast %c8_i32_18 : i32 to vector<8x128xi32>
    %65 = arith.shrui %63, %64 : vector<8x128xi32>
    %66 = arith.sitofp %65 : vector<8x128xi32> to vector<8x128xf32>
    %cst_19 = arith.constant 5.000000e-01 : f32
    %67 = vector.broadcast %cst_19 : f32 to vector<8x128xf32>
    %68 = arith.addf %66, %67 : vector<8x128xf32>
    %cst_20 = arith.constant 5.96046448E-8 : f32
    %69 = vector.broadcast %cst_20 : f32 to vector<8x128xf32>
    %70 = arith.mulf %68, %69 : vector<8x128xf32>
    %71 = math.log %48 : vector<8x128xf32>
    %cst_21 = arith.constant -2.000000e+00 : f32
    %72 = vector.broadcast %cst_21 : f32 to vector<8x128xf32>
    %73 = arith.mulf %72, %71 : vector<8x128xf32>
    %74 = math.sqrt %73 : vector<8x128xf32>
    %cst_22 = arith.constant 0.223606795 : f32
    %75 = vector.broadcast %cst_22 : f32 to vector<8x128xf32>
    %76 = arith.mulf %74, %75 : vector<8x128xf32>
    %cst_23 = arith.constant 6.28318548 : f32
    %77 = vector.broadcast %cst_23 : f32 to vector<8x128xf32>
    %78 = arith.mulf %77, %70 : vector<8x128xf32>
    %79 = math.cos %78 : vector<8x128xf32>
    %80 = arith.mulf %76, %79 : vector<8x128xf32>
    %81 = math.sin %78 : vector<8x128xf32>
    %82 = arith.mulf %76, %81 : vector<8x128xf32>
    %c0_24 = arith.constant 0 : index
    %c0_25 = arith.constant 0 : index
    %83 = vector.load %arg2[%c0_24, %c0_25] : memref<16x128xf32, #tpu.memory_space<vmem>>, vector<8x128xf32>
    %84 = arith.addf %83, %80 : vector<8x128xf32>
    %c0_26 = arith.constant 0 : index
    %c0_27 = arith.constant 0 : index
    %85 = vector.load %arg3[%c0_26, %c0_27] : memref<16x128xf32, #tpu.memory_space<vmem>>, vector<8x128xf32>
    tpu.vector_store %arg3[%c0_26, %c0_27], %84 {strides = array<i32>} : memref<16x128xf32, #tpu.memory_space<vmem>>, vector<8x128xf32>,
    %c8 = arith.constant 8 : index
    %c0_28 = arith.constant 0 : index
    %86 = vector.load %arg2[%c8, %c0_28] : memref<16x128xf32, #tpu.memory_space<vmem>>, vector<8x128xf32>
    %87 = arith.addf %86, %82 : vector<8x128xf32>
    %c8_29 = arith.constant 8 : index
    %c0_30 = arith.constant 0 : index
    %88 = vector.load %arg3[%c8_29, %c0_30] : memref<16x128xf32, #tpu.memory_space<vmem>>, vector<8x128xf32>
    tpu.vector_store %arg3[%c8_29, %c0_30], %87 {strides = array<i32>} : memref<16x128xf32, #tpu.memory_space<vmem>>, vector<8x128xf32>,
    return
  }
  func.func @transform_0(%arg0: i32, %arg1: memref<1xi32, #tpu.memory_space<smem>>) -> (i32, i32) {
    %c0_i32 = arith.constant 0 : i32
    %c0_i32_0 = arith.constant 0 : i32
    return %arg0, %c0_i32 : i32, i32
  }
  func.func @transform_1(%arg0: i32, %arg1: memref<1xi32, #tpu.memory_space<smem>>) -> (i32, i32) {
    %c0_i32 = arith.constant 0 : i32
    %c0_i32_0 = arith.constant 0 : i32
    return %arg0, %c0_i32 : i32, i32
  }
}

</mosaic_0001>

<llo_original>
// kernel: tpu_custom_call.1
$region0: #{tpu_custom_call.1}
  #allocation0 [shape = 'u32[]', space=smem, size = 0x4, offset = 0x4, fixed_abs, tag = 'smem constant byte address 0x4 - core index']
  #allocation1 [shape = 'u32[144,128]{1,0:T(1,128)}', space=vmem, size = 0x12000, scoped, tag = 'internal scratch']
  #allocation2 [shape = 's32[1]{0}', space=sflag, size = 0x4, scoped, tag = 'scoped memory for tpu_custom_call.1']
  #allocation3 [shape = 's32[1]{0:T(128)S(6)}', space=smem, size = 0x200, scoped, tag = 'prefetched SMEM operand 0']
  %s0 = inlined_call_operand.<no memory space> [shape: s32[1], index: 0, kind: input, shape index: {}]
  %s1 = inlined_call_operand.hbm [shape: f32[16,128], index: 1, kind: input, shape index: {}]
  %s2 = inlined_call_operand.hbm [shape: f32[16,128], index: 2, kind: output, shape index: {}]
  %s3 = sld [smem:[#allocation0]]
  $region18: #{tpu_custom_call.1} parent=0
    _
  %s5 = ssub.s32 1, %s3
  %s6 = scalar_select 0, %s5, %s3
  %7 = sst [smem:[#allocation3]] %s0
  $region1: #{tpu_custom_call.1} parent=0
    #allocation4 [shape = 'u8[8192]{0}', space=vmem, size = 0x2000, scoped, tag = 'input window, operand 1, single buffered']
    #allocation5 [shape = 's32[1]{0}', space=sflag, size = 0x4, scoped, tag = 'scoped memory for tpu_custom_call.1']
    #allocation6 [shape = 's32[1]{0}', space=sflag, size = 0x4, scoped, tag = 'scoped memory for tpu_custom_call.1']
    #allocation7 [shape = 'u8[8192]{0}', space=vmem, size = 0x2000, scoped, tag = 'output window, operand 0, single buffered']
    %8 = vsyncpa [#allocation5], 0
    %9 = vsyncpa [#allocation6], 0
    // Predicated region
    $region2: #{tpu_custom_call.1} parent=1 // pred_check
      _
    $region3: #{tpu_custom_call.1} parent=1 // pred_check_branch
      %11 = sbr.rel (0) target = $region5
    $region4: #{tpu_custom_call.1} parent=1 // pred_region
      %s13 = ssub.s32 256, 256
      %14 = vsyncadd [#allocation5], %s13
      %s15 = sshll.u32 [#allocation4], 4
      %s16 = int_to_ptr.vmem [resolvable:$true] %s15
      %21 = dma.hbm_to_vmem [thread:$0]  %s1, 256, %s16, [#allocation5], 128, 128, 8
    $region5: #{tpu_custom_call.1} parent=1 // pred_fallthru
      _
    // Predicated region
    $region6: #{tpu_custom_call.1} parent=1 // pred_check
      _
    $region7: #{tpu_custom_call.1} parent=1 // pred_check_branch
      %23 = sbr.rel (0) target = $region9
    $region8: #{tpu_custom_call.1} parent=1 // pred_region
      %24 = dma.done [#allocation5], 256
    $region9: #{tpu_custom_call.1} parent=1 // pred_fallthru
      _
    %s25 = sld [smem:[#allocation3]]
    %s26 = sadd.s32 %s25, 2654435769
    %s27 = sshrl.u32 %s26, 16
    %s28 = sxor.u32 %s26, %s27
    %s29 = smul.u32 %s28, 2146121005
    %s30 = sshrl.u32 %s29, 15
    %s31 = sxor.u32 %s29, %s30
    %s32 = smul.u32 %s31, 2221713035
    %s33 = sshrl.u32 %s32, 16
    %s34 = sxor.u32 %s32, %s33
    %s35 = sadd.s32 %s25, 2246822507
    %s36 = sshrl.u32 %s35, 16
    %s37 = sxor.u32 %s35, %s36
    %s38 = smul.u32 %s37, 2146121005
    %s39 = sshrl.u32 %s38, 15
    %s40 = sxor.u32 %s38, %s39
    %s41 = smul.u32 %s40, 2221713035
    %s42 = sshrl.u32 %s41, 16
    %s43 = sxor.u32 %s41, %s42
    %v44 = vlaneseq
    %v45 = vshrl.u32 %v44, 7
    %v46 = vlaneseq
    %v47 = vand.u32 %v46, 127
    %s48 = smul.u32 0, 8
    %v49 = vstv %s48
    %v50 = vadd.s32 %v49, %v45
    %v51 = vmul.u32 %v50, 128
    %v52 = vadd.s32 %v51, %v47
    %v53 = vstv %s34
    %v54 = vxor.u32 %v52, %v53
    %v55 = vshrl.u32 %v54, 16
    %v56 = vxor.u32 %v54, %v55
    %v57 = vmul.u32 %v56, 2146121005
    %v58 = vshrl.u32 %v57, 15
    %v59 = vxor.u32 %v57, %v58
    %v60 = vmul.u32 %v59, 2221713035
    %v61 = vshrl.u32 %v60, 16
    %v62 = vxor.u32 %v60, %v61
    %v63 = vshrl.u32 %v62, 8
    %v64 = vcvt.s32.f32 %v63
    %v65 = vadd.f32 %v64, 0.5
    %v66 = vmul.f32 %v65, 5.9604645e-08
    %v67 = vstv %s43
    %v68 = vxor.u32 %v52, %v67
    %v69 = vshrl.u32 %v68, 16
    %v70 = vxor.u32 %v68, %v69
    %v71 = vmul.u32 %v70, 2146121005
    %v72 = vshrl.u32 %v71, 15
    %v73 = vxor.u32 %v71, %v72
    %v74 = vmul.u32 %v73, 2221713035
    %v75 = vshrl.u32 %v74, 16
    %v76 = vxor.u32 %v74, %v75
    %v77 = vshrl.u32 %v76, 8
    %v78 = vcvt.s32.f32 %v77
    %v79 = vadd.f32 %v78, 0.5
    %v80 = vmul.f32 %v79, 5.9604645e-08
    %v81 = vlog2.pop %v66
    %v82 = vmul.f32 %v81, 0.6931472
    %v83 = vmul.f32 %v82, -2.0
    %v84 = vrsqrt.pop %v83
    %v85 = vmul.f32 %v83, %v84
    %vm86 = vcmp.eq.f32.partialorder %v83, inf
    %v87 = vsel %vm86, %v83, %v85
    %vm88 = vcmp.eq.f32.partialorder %v83, 0.0
    %v89 = vand.u32 %v83, 2147483648
    %v90 = vsel %vm88, %v89, %v87
    %v91 = vmul.f32 %v90, 0.2236068
    %v92 = vmul.f32 %v80, 6.2831855
    %v93 = vand.u32 2147483647, %v92
    %vm94 = vcmp.le.f32.partialorder %v93, 0.7853982
    %vm95 = vcmp.lt.s32.totalorder %v92, 0
    %v96 = vand.u32 %v92, 2139095040
    %v97 = vshrl.u32 %v96, 23
    %v98 = vsub.s32 %v97, 127
    %v99 = vand.u32 2147483647, %v92
    %v100 = vand.u32 %v99, 8388607
    %v101 = vor.u32 %v100, 8388608
    %v102 = vsub.s32 0, %v101
    %v103 = vadd.s32 %v98, 1
    %vm104 = vcmp.gt.s32.totalorder %v103, 0
    %v105 = vsel %vm104, %v103, 0
    %v106 = vshrl.u32 %v105, 5
    %v107 = vand.u32 %v105, 31
    %v108 = vsub.s32 32, %v107
    %v109 = vshrl.u32 683565275, %v108
    %v110 = vshll.u32 683565275, %v107
    %v111 = vshrl.u32 2475754826, %v108
    %v112 = vor.u32 %v110, %v111
    %v113 = vshll.u32 2475754826, %v107
    %v114 = vshrl.u32 2131351028, %v108
    %v115 = vor.u32 %v113, %v114
    %v116 = vshll.u32 2131351028, %v107
    %v117 = vshrl.u32 2102212464, %v108
    %v118 = vor.u32 %v116, %v117
    %v119 = vshll.u32 2102212464, %v107
    %v120 = vshrl.u32 920167782, %v108
    %v121 = vor.u32 %v119, %v120
    %v122 = vshll.u32 920167782, %v107
    %v123 = vshrl.u32 1326507024, %v108
    %v124 = vor.u32 %v122, %v123
    %vm125 = vcmp.lt.s32.totalorder %v106, 1
    %vm126 = vcmp.lt.s32.totalorder %v106, 2
    %vm127 = vcmp.lt.s32.totalorder %v106, 3
    %vm128 = vcmp.lt.s32.totalorder %v106, 4
    %v129 = vsel %vm125, %v109, %v112
    %v130 = vsel %vm128, %v118, 2102212464
    %v131 = vsel %vm127, %v115, %v130
    %v132 = vsel %vm126, %v129, %v131
    %v133 = vsel %vm125, %v112, %v115
    %v134 = vsel %vm128, %v121, 920167782
    %v135 = vsel %vm127, %v118, %v134
    %v136 = vsel %vm126, %v133, %v135
    %v137 = vsel %vm125, %v115, %v118
    %v138 = vsel %vm128, %v124, 1326507024
    %v139 = vsel %vm127, %v121, %v138
    %v140 = vsel %vm126, %v137, %v139
    %v141 = vshll.u32 %v101, 8
    %v142 = vmul.u32.u64.compose %v141, %v140
    %v143 = vextract.low.u32 %v142
    %v144 = vextract.high.u32 %v142
    %v145 = vmul.u32.u64.compose %v141, %v136
    %v146 = vextract.low.u32 %v145
    %v147 = vextract.high.u32 %v145
    %v148 = vmul.u32 %v141, %v132
    %v149 = vadd.s32 %v144, %v146
    %vm150 = vc.u32 %v144, %v146
    %v151 = vadd.s32 %v147, 1
    %v152 = vsel %vm150, %v151, %v147
    %v153 = vadd.s32 %v148, %v152
    %v154 = vadd.s32 %v153, 536870912
    %v155 = vshrl.u32 %v154, 30
    %v156 = vshll.u32 %v155, 30
    %v157 = vsub.s32 %v153, %v156
    %vm158 = vcmp.lt.s32.totalorder %v157, 0
    %v159 = vsub.s32 0, %v157
    %v160 = vsel %vm158, %v159, %v157
    %v161 = vclz %v160
    %v162 = vsub.s32 %v161, 2
    %vm163 = vcmp.gt.s32.totalorder 0, %v162
    %v164 = vsel %vm163, 0, %v162
    %v165 = vsub.s32 32, %v164
    %v166 = vshll.u32 %v157, %v164
    %v167 = vshrl.u32 %v149, %v165
    %v168 = vor.u32 %v166, %v167
    %v169 = vsub.s32 4294967266, %v164
    %v170 = vadd.s32 %v169, 127
    %v171 = vshll.u32 %v170, 23
    %v172 = vor.u32 4788187, %v171
    %v173 = vand.u32 2147483647, %v172
    %v175 = vcvt.s32.f32 %v168
    %v176 = vmul.f32 %v175, %v173
    %v177 = vxor.u32 %v176, 2147483648
    %v178 = vsel %vm95, %v177, %v176
    %v179 = vsub.s32 4, %v155
    %v180 = vsel %vm95, %v179, %v155
    %v181 = vsel %vm94, %v92, %v178
    %v182 = vsel %vm94, 0, %v180
    %v183 = vcosq.f32.pop %v181
    %v184 = vsinq.f32.pop %v181
    %vm185 = vweird.f32 %v92
    %v186 = vand.u32 %v182, 3
    %vm187 = vcmp.lt.s32.totalorder %v186, 2
    %vm188 = vcmp.eq.s32.totalorder %v186, 0
    %v189 = vxor.u32 %v184, 2147483648
    %v190 = vsel %vm188, %v183, %v189
    %vm191 = vcmp.eq.s32.totalorder %v186, 2
    %v192 = vxor.u32 %v183, 2147483648
    %v193 = vsel %vm191, %v192, %v184
    %v194 = vsel %vm187, %v190, %v193
    %v195 = vsel %vm185, nan, %v194
    %v196 = vmul.f32 %v91, %v195
    %v197 = vand.u32 2147483647, %v92
    %vm198 = vcmp.le.f32.partialorder %v197, 0.7853982
    %vm199 = vcmp.lt.s32.totalorder %v92, 0
    %v200 = vand.u32 %v92, 2139095040
    %v201 = vshrl.u32 %v200, 23
    %v202 = vsub.s32 %v201, 127
    %v203 = vand.u32 2147483647, %v92
    %v204 = vand.u32 %v203, 8388607
    %v205 = vor.u32 %v204, 8388608
    %v206 = vsub.s32 0, %v205
    %v207 = vadd.s32 %v202, 1
    %vm208 = vcmp.gt.s32.totalorder %v207, 0
    %v209 = vsel %vm208, %v207, 0
    %v210 = vshrl.u32 %v209, 5
    %v211 = vand.u32 %v209, 31
    %v212 = vsub.s32 32, %v211
    %v213 = vshrl.u32 683565275, %v212
    %v214 = vshll.u32 683565275, %v211
    %v215 = vshrl.u32 2475754826, %v212
    %v216 = vor.u32 %v214, %v215
    %v217 = vshll.u32 2475754826, %v211
    %v218 = vshrl.u32 2131351028, %v212
    %v219 = vor.u32 %v217, %v218
    %v220 = vshll.u32 2131351028, %v211
    %v221 = vshrl.u32 2102212464, %v212
    %v222 = vor.u32 %v220, %v221
    %v223 = vshll.u32 2102212464, %v211
    %v224 = vshrl.u32 920167782, %v212
    %v225 = vor.u32 %v223, %v224
    %v226 = vshll.u32 920167782, %v211
    %v227 = vshrl.u32 1326507024, %v212
    %v228 = vor.u32 %v226, %v227
    %vm229 = vcmp.lt.s32.totalorder %v210, 1
    %vm230 = vcmp.lt.s32.totalorder %v210, 2
    %vm231 = vcmp.lt.s32.totalorder %v210, 3
    %vm232 = vcmp.lt.s32.totalorder %v210, 4
    %v233 = vsel %vm229, %v213, %v216
    %v234 = vsel %vm232, %v222, 2102212464
    %v235 = vsel %vm231, %v219, %v234
    %v236 = vsel %vm230, %v233, %v235
    %v237 = vsel %vm229, %v216, %v219
    %v238 = vsel %vm232, %v225, 920167782
    %v239 = vsel %vm231, %v222, %v238
    %v240 = vsel %vm230, %v237, %v239
    %v241 = vsel %vm229, %v219, %v222
    %v242 = vsel %vm232, %v228, 1326507024
    %v243 = vsel %vm231, %v225, %v242
    %v244 = vsel %vm230, %v241, %v243
    %v245 = vshll.u32 %v205, 8
    %v246 = vmul.u32.u64.compose %v245, %v244
    %v247 = vextract.low.u32 %v246
    %v248 = vextract.high.u32 %v246
    %v249 = vmul.u32.u64.compose %v245, %v240
    %v250 = vextract.low.u32 %v249
    %v251 = vextract.high.u32 %v249
    %v252 = vmul.u32 %v245, %v236
    %v253 = vadd.s32 %v248, %v250
    %vm254 = vc.u32 %v248, %v250
    %v255 = vadd.s32 %v251, 1
    %v256 = vsel %vm254, %v255, %v251
    %v257 = vadd.s32 %v252, %v256
    %v258 = vadd.s32 %v257, 536870912
    %v259 = vshrl.u32 %v258, 30
    %v260 = vshll.u32 %v259, 30
    %v261 = vsub.s32 %v257, %v260
    %vm262 = vcmp.lt.s32.totalorder %v261, 0
    %v263 = vsub.s32 0, %v261
    %v264 = vsel %vm262, %v263, %v261
    %v265 = vclz %v264
    %v266 = vsub.s32 %v265, 2
    %vm267 = vcmp.gt.s32.totalorder 0, %v266
    %v268 = vsel %vm267, 0, %v266
    %v269 = vsub.s32 32, %v268
    %v270 = vshll.u32 %v261, %v268
    %v271 = vshrl.u32 %v253, %v269
    %v272 = vor.u32 %v270, %v271
    %v273 = vsub.s32 4294967266, %v268
    %v274 = vadd.s32 %v273, 127
    %v275 = vshll.u32 %v274, 23
    %v276 = vor.u32 4788187, %v275
    %v277 = vand.u32 2147483647, %v276
    %v279 = vcvt.s32.f32 %v272
    %v280 = vmul.f32 %v279, %v277
    %v281 = vxor.u32 %v280, 2147483648
    %v282 = vsel %vm199, %v281, %v280
    %v283 = vsub.s32 4, %v259
    %v284 = vsel %vm199, %v283, %v259
    %v285 = vsel %vm198, %v92, %v282
    %v286 = vsel %vm198, 0, %v284
    %v287 = vcosq.f32.pop %v285
    %v288 = vsinq.f32.pop %v285
    %vm289 = vweird.f32 %v92
    %v290 = vadd.s32 %v286, 3
    %v291 = vand.u32 %v290, 3
    %vm292 = vcmp.lt.s32.totalorder %v291, 2
    %vm293 = vcmp.eq.s32.totalorder %v291, 0
    %v294 = vxor.u32 %v288, 2147483648
    %v295 = vsel %vm293, %v287, %v294
    %vm296 = vcmp.eq.s32.totalorder %v291, 2
    %v297 = vxor.u32 %v287, 2147483648
    %v298 = vsel %vm296, %v297, %v288
    %v299 = vsel %vm292, %v295, %v298
    %v300 = vsel %vm289, nan, %v299
    %v301 = vmul.f32 %v91, %v300
    %v302 = vld [vmem:[#allocation4] sm:$0xff]
    %v303 = vadd.f32 %v302, %v196
    %304 = vst [vmem:[#allocation7] sm:$0xff] %v303
    %v305 = vld [vmem:[#allocation4 + $0x8] sm:$0xff]
    %v306 = vadd.f32 %v305, %v301
    %307 = vst [vmem:[#allocation7 + $0x8] sm:$0xff] %v306
    // Predicated region
    $region10: #{tpu_custom_call.1} parent=1 // pred_check
      _
    $region11: #{tpu_custom_call.1} parent=1 // pred_check_branch
      %309 = sbr.rel (0) target = $region13
    $region12: #{tpu_custom_call.1} parent=1 // pred_region
      %s311 = ssub.s32 256, 256
      %312 = vsyncadd [#allocation6], %s311
      %s313 = sshll.u32 [#allocation7], 4
      %s314 = int_to_ptr.vmem [resolvable:$true] %s313
      %319 = dma.vmem_to_hbm [thread:$0]  %s314, 256, %s2, [#allocation6], 128, 128, 8
    $region13: #{tpu_custom_call.1} parent=1 // pred_fallthru
      _
    // Predicated region
    $region14: #{tpu_custom_call.1} parent=1 // pred_check
      _
    $region15: #{tpu_custom_call.1} parent=1 // pred_check_branch
      %321 = sbr.rel (0) target = $region17
    $region16: #{tpu_custom_call.1} parent=1 // pred_region
      %322 = dma.done [#allocation6], 256
    $region17: #{tpu_custom_call.1} parent=1 // pred_fallthru
      _
    %323 = vsyncpa [#allocation5], 1
    %324 = vsyncpa [#allocation6], 1

</llo_original>
